<compile_context>
chip_gen: v7x
topology: tpu7x:2x2x1
jax: 0.10.0
libtpu: 0.0.40
codegen_flags: <defaults>
</compile_context>

<pallas_src>
import jax
import jax.numpy as jnp
from jax.experimental import pallas as pl
from jax.experimental.pallas import tpu as pltpu

IN_FEATURES = 768   # fixed in the PyTorch module (BERT hidden size)
FC_DIM = 64         # CFG.FC_DIM_BERT (synthetic small value)
N_CLASSES = 16      # CFG.CLASSES_BERT (synthetic small value)
BN_EPS = 1e-5       # nn.BatchNorm1d default eps

LANE = 128
SUBLANE = 8


# ----------------------------------------------------------------------------
# VMEM budgeting helpers
# ----------------------------------------------------------------------------
def _vmem_limit_bytes():
    """Generation-aware scoped-VMEM limit (v5e/v6e: 128 MiB phys, v7x: 64 MiB)."""
    try:
        phys = int(pltpu.get_tpu_info().vmem_capacity_bytes)
    except Exception:
        phys = 0
    if phys < (16 << 20):          # detection failed / bogus -> assume smallest (v7x)
        phys = 64 << 20
    # leave ~25% physical headroom for compiler-internal scratch, cap at 100 MiB
    return min((phys // 4) * 3, 100 << 20)


def _pool_step_bytes(tb, ts, H, emb_itemsize):
    """Approximate per-grid-step VMEM footprint of the pooling body."""
    emb_in = tb * ts * H * emb_itemsize          # one HBM-dtype input buffer
    emb_f32 = tb * ts * H * 4                    # f32 widened tile
    mask_in = tb * ts * 4
    resident = 2 * tb * H * 4 + tb * 4 + (IN_FEATURES * LANE * 2)  # acc/cnt/(fused w)
    # 2x double-buffered inputs + ~3.5x f32 tile of elementwise temporaries
    # (widen, mask broadcast, product) + resident accumulators.
    return 2 * (emb_in + mask_in) + int(3.5 * emb_f32) + resident


def _plan_tiles(B, S, H, emb_itemsize, budget, tb_fixed=None):
    """Pick (tb, ts, s_pad) within the VMEM budget, or None if impossible."""
    # ---- batch tile: multiple of 8 (or full B); prefer >=2 B-tiles ---------
    if tb_fixed is not None:
        tb = tb_fixed
    elif B % SUBLANE == 0:
        tb = SUBLANE
        for cand in (32, 24, 16):
            if B % cand == 0 and B // cand >= 2 and \
               _pool_step_bytes(cand, LANE, H, emb_itemsize) <= budget:
                tb = cand
                break
    else:
        tb = B
    # ---- sequence tile ------------------------------------------------------
    if S % LANE != 0:
        # small unaligned S: a single full-S block (no wrapper pad) if it fits
        if _pool_step_bytes(tb, S, H, emb_itemsize) <= budget:
            return tb, S, S
        s_pad = ((S + LANE - 1) // LANE) * LANE
    else:
        s_pad = S
    best = None
    ts = LANE
    while ts <= s_pad:
        if s_pad % ts == 0 and _pool_step_bytes(tb, ts, H, emb_itemsize) <= budget:
            best = ts
        ts += LANE
    if best is None:
        return None
    return tb, best, s_pad


# ----------------------------------------------------------------------------
# Kernel 1: masked mean pooling (the `mean_pooling` helper)
#   sum_t(emb[b,t,h] * mask[b,t]) / clamp(sum_t mask[b,t], min=1e-9)
# Tiled over (B tiles, S tiles); the output block (same index across the S
# axis) is the running f32 accumulator; cnt_ref accumulates the mask sums.
# ----------------------------------------------------------------------------
def _mean_pool_kernel(emb_ref, mask_ref, out_ref, cnt_ref):
    s = pl.program_id(1)

    @pl.when(s == 0)
    def _init():
        out_ref[...] = jnp.zeros_like(out_ref)
        cnt_ref[...] = jnp.zeros_like(cnt_ref)

    emb = emb_ref[...].astype(jnp.float32)        # [tb, ts, H] widened in-register
    mask = mask_ref[...].astype(jnp.float32)      # [tb, ts]    (.float())
    out_ref[...] += jnp.sum(emb * mask[:, :, None], axis=1)   # [tb, H]
    cnt_ref[...] += jnp.sum(mask, axis=1, keepdims=True)      # [tb, 1]

    @pl.when(s == pl.num_programs(1) - 1)
    def _finalize():
        # torch.clamp(sum_mask, min=1e-9)
        out_ref[...] = out_ref[...] / jnp.maximum(cnt_ref[...], 1e-9)


def mean_pooling_pallas(token_embeddings, attention_mask):
    B, S, H = token_embeddings.shape
    vmem_limit = _vmem_limit_bytes()
    budget = max(vmem_limit - (4 << 20), 24 << 20)
    itemsize = jnp.dtype(token_embeddings.dtype).itemsize

    b_pad = B
    plan = _plan_tiles(B, S, H, itemsize, budget)
    if plan is None:
        # large batch not a multiple of 8: pad B so tb=8..32 tiling applies
        b_pad = ((B + SUBLANE - 1) // SUBLANE) * SUBLANE
        plan = _plan_tiles(b_pad, S, H, itemsize, budget)
    tb, ts, s_pad = plan

    emb, mask = token_embeddings, attention_mask
    if s_pad != S or b_pad != B:
        emb = jnp.pad(emb, ((0, b_pad - B), (0, s_pad - S), (0, 0)))
        mask = jnp.pad(mask, ((0, b_pad - B), (0, s_pad - S)))

    grid = (b_pad // tb, s_pad // ts)
    out = pl.pallas_call(
        _mean_pool_kernel,
        out_shape=jax.ShapeDtypeStruct((b_pad, H), jnp.float32),
        grid_spec=pltpu.PrefetchScalarGridSpec(
            num_scalar_prefetch=0,
            grid=grid,
            in_specs=[
                pl.BlockSpec((tb, ts, H), lambda b, s: (b, s, 0)),
                pl.BlockSpec((tb, ts), lambda b, s: (b, s)),
            ],
            out_specs=pl.BlockSpec((tb, H), lambda b, s: (b, 0)),
            scratch_shapes=[pltpu.VMEM((tb, 1), jnp.float32)],
        ),
        compiler_params=pltpu.CompilerParams(
            # TODO(synk): use pltpu.CORE_PARALLEL on the B axis on v7x (2 TCs).
            dimension_semantics=("parallel", "arbitrary"),
            vmem_limit_bytes=vmem_limit),
    )(emb, mask)
    return out[:B] if b_pad != B else out


# ----------------------------------------------------------------------------
# Kernel 2 (training feature path, FUSED): masked mean pooling accumulated in
# a VMEM scratch, then in the last S step: Dropout(p=0) [identity] ->
# Linear(768, FC) [bf16 MXU, f32 accumulate] -> BatchNorm1d(FC) with batch
# statistics.  Whole batch in ONE block (full-batch BN statistics).
# ----------------------------------------------------------------------------
def _fused_pool_fc_bn_kernel(emb_ref, mask_ref, w_ref, gamma_ref, beta_ref,
                             out_ref, pooled_ref, cnt_ref):
    s = pl.program_id(0)

    @pl.when(s == 0)
    def _init():
        pooled_ref[...] = jnp.zeros_like(pooled_ref)
        cnt_ref[...] = jnp.zeros_like(cnt_ref)

    emb = emb_ref[...].astype(jnp.float32)        # [B, ts, H]
    mask = mask_ref[...].astype(jnp.float32)      # [B, ts]
    pooled_ref[...] += jnp.sum(emb * mask[:, :, None], axis=1)
    cnt_ref[...] += jnp.sum(mask, axis=1, keepdims=True)

    @pl.when(s == pl.num_programs(0) - 1)
    def _finalize():
        x = pooled_ref[...] / jnp.maximum(cnt_ref[...], 1e-9)       # [B, 768]
        # Linear bias omitted: zero-initialized in _init_params AND it cancels
        # exactly under the training-mode BatchNorm batch-mean subtraction.
        y = jnp.dot(x.astype(jnp.bfloat16), w_ref[...],
                    preferred_element_type=jnp.float32)             # [B, FCp]
        mu = jnp.mean(y, axis=0, keepdims=True)
        var = jnp.mean((y - mu) ** 2, axis=0, keepdims=True)        # biased var
        out_ref[...] = (gamma_ref[...] * (y - mu) * jax.lax.rsqrt(var + BN_EPS)
                        + beta_ref[...])


def pool_fc_bn_fused_pallas(token_embeddings, attention_mask,
                            w_t_bf16, gamma, beta, fc_dim):
    """Returns [B, fc_dim] features, or None if B does not fit one block."""
    B, S, H = token_embeddings.shape
    fc_pad = w_t_bf16.shape[1]
    vmem_limit = _vmem_limit_bytes()
    budget = max(vmem_limit - (4 << 20), 24 << 20)
    itemsize = jnp.dtype(token_embeddings.dtype).itemsize

    plan = _plan_tiles(B, S, H, itemsize, budget, tb_fixed=B)
    if plan is None:
        return None
    _, ts, s_pad = plan

    emb, mask = token_embeddings, attention_mask
    if s_pad != S:
        emb = jnp.pad(emb, ((0, 0), (0, s_pad - S), (0, 0)))
        mask = jnp.pad(mask, ((0, 0), (0, s_pad - S)))

    out = pl.pallas_call(
        _fused_pool_fc_bn_kernel,
        out_shape=jax.ShapeDtypeStruct((B, fc_pad), jnp.float32),
        grid_spec=pltpu.PrefetchScalarGridSpec(
            num_scalar_prefetch=0,
            grid=(s_pad // ts,),
            in_specs=[
                pl.BlockSpec((B, ts, H), lambda s: (0, s, 0)),
                pl.BlockSpec((B, ts), lambda s: (0, s)),
                pl.BlockSpec((H, fc_pad), lambda s: (0, 0)),   # resident weight
                pl.BlockSpec((1, fc_pad), lambda s: (0, 0)),
                pl.BlockSpec((1, fc_pad), lambda s: (0, 0)),
            ],
            out_specs=pl.BlockSpec((B, fc_pad), lambda s: (0, 0)),
            scratch_shapes=[pltpu.VMEM((B, H), jnp.float32),
                            pltpu.VMEM((B, 1), jnp.float32)],
        ),
        compiler_params=pltpu.CompilerParams(
            dimension_semantics=("arbitrary",),
            vmem_limit_bytes=vmem_limit),
    )(emb, mask, w_t_bf16, gamma, beta)
    return out[:, :fc_dim]


# ----------------------------------------------------------------------------
# Kernel 3 (fallback for very large B): standalone Linear(768, FC) -> BN1d.
# ----------------------------------------------------------------------------
def _fc_bn_kernel(x_ref, w_ref, gamma_ref, beta_ref, out_ref):
    x = x_ref[...].astype(jnp.bfloat16)                               # [B, 768]
    y = jnp.dot(x, w_ref[...], preferred_element_type=jnp.float32)    # [B, FCp]
    mu = jnp.mean(y, axis=0, keepdims=True)
    var = jnp.mean((y - mu) ** 2, axis=0, keepdims=True)
    out_ref[...] = (gamma_ref[...] * (y - mu) * jax.lax.rsqrt(var + BN_EPS)
                    + beta_ref[...])


def fc_bn_pallas(x, w_t_bf16, gamma, beta, fc_dim):
    B, H = x.shape
    fc_pad = w_t_bf16.shape[1]
    out = pl.pallas_call(
        _fc_bn_kernel,
        out_shape=jax.ShapeDtypeStruct((B, fc_pad), jnp.float32),
        in_specs=[
            pl.BlockSpec((B, H), lambda: (0, 0)),
            pl.BlockSpec((H, fc_pad), lambda: (0, 0)),
            pl.BlockSpec((1, fc_pad), lambda: (0, 0)),
            pl.BlockSpec((1, fc_pad), lambda: (0, 0)),
        ],
        out_specs=pl.BlockSpec((B, fc_pad), lambda: (0, 0)),
        compiler_params=pltpu.CompilerParams(
            vmem_limit_bytes=_vmem_limit_bytes()),
    )(x, w_t_bf16, gamma, beta)
    return out[:, :fc_dim]


# ----------------------------------------------------------------------------
# Model wrapper (mirrors ShopeeBertModel.forward / extract_features semantics)
# ----------------------------------------------------------------------------
class ShopeeBertModelPallas:
    def __init__(self, key, n_classes=N_CLASSES, fc_dim=FC_DIM, use_fc=True):
        self.use_fc = use_fc
        self.fc_dim = fc_dim
        fc_pad = max(LANE, ((fc_dim + LANE - 1) // LANE) * LANE)
        self.fc_pad = fc_pad
        # _init_params(): xavier_normal_ classifier weight, zero bias,
        #                 BN weight=1, BN bias=0   (deterministic via PRNGKey)
        std = (2.0 / (IN_FEATURES + fc_dim)) ** 0.5
        w = std * jax.random.normal(key, (fc_dim, IN_FEATURES), dtype=jnp.float32)
        w_t = jnp.transpose(w)                                       # [768, fc]
        w_t_pad = (jnp.zeros((IN_FEATURES, fc_pad), jnp.float32)
                   .at[:, :fc_dim].set(w_t))
        self.classifier_w_t = w_t_pad                       # f32 master (reference)
        self.classifier_w_t_bf16 = w_t_pad.astype(jnp.bfloat16)   # MXU operand
        self.bn_gamma = jnp.zeros((1, fc_pad), jnp.float32).at[:, :fc_dim].set(1.0)
        self.bn_beta = jnp.zeros((1, fc_pad), jnp.float32)
        # TODO(synk): tokenizer + pretrained BERT backbone + ArcMarginProduct
        # head (training logits) are external pretrained components, not
        # re-implemented in Pallas.

    def extract_features(self, token_embeddings, attention_mask, training=False):
        if self.use_fc and training:
            # nn.Dropout(p=0.0) is the identity.
            fused = pool_fc_bn_fused_pallas(
                token_embeddings, attention_mask, self.classifier_w_t_bf16,
                self.bn_gamma, self.bn_beta, self.fc_dim)
            if fused is not None:
                return fused                                         # [B, FC]
            x = mean_pooling_pallas(token_embeddings, attention_mask)
            return fc_bn_pallas(x, self.classifier_w_t_bf16, self.bn_gamma,
                                self.bn_beta, self.fc_dim)           # [B, FC]
        return mean_pooling_pallas(token_embeddings, attention_mask)  # [B, 768]

    def forward(self, token_embeddings, attention_mask, training=False):
        features = self.extract_features(token_embeddings, attention_mask, training)
        if training:
            # TODO(synk): would apply ArcMarginProduct(features, labels) here.
            return features
        return features


# ----------------------------------------------------------------------------
# Reference helpers (pure JAX) used by the self-test
# ----------------------------------------------------------------------------
def _ref_mean_pool(emb, mask):
    mf = mask.astype(jnp.float32)[:, :, None]
    return (jnp.sum(emb.astype(jnp.float32) * mf, 1)
            / jnp.maximum(jnp.sum(mf, 1), 1e-9))


def _ref_fc_bn(pooled, w_t_bf16, fc_dim):
    x = pooled.astype(jnp.bfloat16).astype(jnp.float32)
    w = w_t_bf16[:, :fc_dim].astype(jnp.float32)
    y = jnp.dot(x, w, precision=jax.lax.Precision.HIGHEST)
    mu = jnp.mean(y, axis=0, keepdims=True)
    var = jnp.mean((y - mu) ** 2, axis=0, keepdims=True)
    return (y - mu) * jax.lax.rsqrt(var + BN_EPS)     # gamma=1, beta=0


if __name__ == "__main__":
    key = jax.random.PRNGKey(0)
    k_emb, k_emb2, k_model = jax.random.split(key, 3)

    model = ShopeeBertModelPallas(k_model)

    # ---- Case 1: small unaligned shape (B=4, S=8), f32 inputs ---------------
    B, S, H = 4, 8, IN_FEATURES
    token_embeddings = jax.random.normal(k_emb, (B, S, H), dtype=jnp.float32)
    lengths = jnp.array([8, 5, 3, 7], dtype=jnp.int32)
    attention_mask = (jnp.arange(S)[None, :] < lengths[:, None]).astype(jnp.int32)

    feats_eval = jax.block_until_ready(
        model.forward(token_embeddings, attention_mask, training=False))
    feats_train = jax.block_until_ready(
        model.extract_features(token_embeddings, attention_mask, training=True))

    pooled_ref = _ref_mean_pool(token_embeddings, attention_mask)
    assert feats_eval.shape == (B, H)
    assert bool(jnp.allclose(feats_eval, pooled_ref, atol=1e-4, rtol=1e-4))

    train_ref = _ref_fc_bn(pooled_ref, model.classifier_w_t_bf16, FC_DIM)
    assert feats_train.shape == (B, FC_DIM)
    assert bool(jnp.allclose(feats_train, train_ref, atol=2e-2, rtol=2e-2))

    # Exercise the standalone (large-B fallback) FC+BN kernel too.
    feats_train_fb = jax.block_until_ready(
        fc_bn_pallas(feats_eval, model.classifier_w_t_bf16,
                     model.bn_gamma, model.bn_beta, FC_DIM))
    assert bool(jnp.allclose(feats_train_fb, train_ref, atol=2e-2, rtol=2e-2))

    # ---- Case 2: multi-tile grid (B and S both tiled), bf16 inputs ----------
    B2, S2 = 16, 512
    emb2 = jax.random.normal(k_emb2, (B2, S2, H), dtype=jnp.bfloat16)
    lengths2 = jnp.arange(1, B2 + 1, dtype=jnp.int32) * (S2 // B2)
    mask2 = (jnp.arange(S2)[None, :] < lengths2[:, None]).astype(jnp.int32)

    feats2 = jax.block_until_ready(model.forward(emb2, mask2, training=False))
    pooled_ref2 = _ref_mean_pool(emb2, mask2)
    assert feats2.shape == (B2, H)
    assert bool(jnp.allclose(feats2, pooled_ref2, atol=1e-3, rtol=1e-3))

    feats2_train = jax.block_until_ready(
        model.extract_features(emb2, mask2, training=True))
    train_ref2 = _ref_fc_bn(pooled_ref2, model.classifier_w_t_bf16, FC_DIM)
    assert feats2_train.shape == (B2, FC_DIM)
    assert bool(jnp.allclose(feats2_train, train_ref2, atol=2e-2, rtol=2e-2))

    print("KERNEL_OK")
</pallas_src>

<mosaic_0001>
module attributes {stable_mosaic.version = 11 : i64} {
  func.func @_mean_pool_kernel(%arg0: i32, %arg1: i32, %arg2: memref<4x8x768xf32, #tpu.memory_space<vmem>>, %arg3: memref<4x8xi32, #tpu.memory_space<vmem>>, %arg4: memref<4x768xf32, #tpu.memory_space<vmem>>, %arg5: memref<4x1xf32, #tpu.memory_space<vmem>>) attributes {dimension_semantics = [#tpu.dimension_semantics<parallel>, #tpu.dimension_semantics<arbitrary>], iteration_bounds = array<i64: 1, 1>, scalar_prefetch = 0 : i64, scratch_operands = 1 : i64, tpu.core_type = #tpu.core_type<tc>, window_params = [{transform_indices = @transform_0, window_bounds = array<i64: 4, 8, 768>}, {transform_indices = @transform_1, window_bounds = array<i64: 4, 8>}, {transform_indices = @transform_2, window_bounds = array<i64: 4, 768>}]} {
    %c0_i32 = arith.constant 0 : i32
    %0 = arith.cmpi eq, %arg1, %c0_i32 : i32
    %1 = arith.extui %0 : i1 to i32
    %c0_i32_0 = arith.constant 0 : i32
    %2 = arith.cmpi ne, %1, %c0_i32_0 : i32
    scf.if %2 {
      %cst_16 = arith.constant 0.000000e+00 : f32
      %21 = vector.broadcast %cst_16 : f32 to vector<4x768xf32>
      %c0_17 = arith.constant 0 : index
      %c0_18 = arith.constant 0 : index
      %22 = vector.load %arg4[%c0_17, %c0_18] : memref<4x768xf32, #tpu.memory_space<vmem>>, vector<4x768xf32>
      tpu.vector_store %arg4[%c0_17, %c0_18], %21 {strides = array<i32>} : memref<4x768xf32, #tpu.memory_space<vmem>>, vector<4x768xf32>,
      %cst_19 = arith.constant 0.000000e+00 : f32
      %23 = vector.broadcast %cst_19 : f32 to vector<4x1xf32>
      %c0_20 = arith.constant 0 : index
      %c0_21 = arith.constant 0 : index
      %24 = vector.load %arg5[%c0_20, %c0_21] : memref<4x1xf32, #tpu.memory_space<vmem>>, vector<4x1xf32>
      tpu.vector_store %arg5[%c0_20, %c0_21], %23 {strides = array<i32>} : memref<4x1xf32, #tpu.memory_space<vmem>>, vector<4x1xf32>,
    } else {
    }
    %c0 = arith.constant 0 : index
    %c0_1 = arith.constant 0 : index
    %c0_2 = arith.constant 0 : index
    %3 = vector.load %arg2[%c0, %c0_1, %c0_2] : memref<4x8x768xf32, #tpu.memory_space<vmem>>, vector<4x8x768xf32>
    %c0_3 = arith.constant 0 : index
    %c0_4 = arith.constant 0 : index
    %4 = vector.load %arg3[%c0_3, %c0_4] : memref<4x8xi32, #tpu.memory_space<vmem>>, vector<4x8xi32>
    %5 = arith.sitofp %4 : vector<4x8xi32> to vector<4x8xf32>
    %c0_5 = arith.constant 0 : index
    %c0_6 = arith.constant 0 : index
    %6 = vector.load %arg4[%c0_5, %c0_6] : memref<4x768xf32, #tpu.memory_space<vmem>>, vector<4x768xf32>
    %7 = vector.shape_cast %5 : vector<4x8xf32> to vector<4x8x1xf32>
    %8 = vector.broadcast %7 : vector<4x8x1xf32> to vector<4x8x768xf32>
    %9 = arith.mulf %3, %8 : vector<4x8x768xf32>
    %cst = arith.constant dense<0.000000e+00> : vector<4x768xf32>
    %10 = vector.multi_reduction <add>, %9, %cst [1] : vector<4x8x768xf32> to vector<4x768xf32>
    %11 = arith.addf %6, %10 : vector<4x768xf32>
    %c0_7 = arith.constant 0 : index
    %c0_8 = arith.constant 0 : index
    %12 = vector.load %arg4[%c0_7, %c0_8] : memref<4x768xf32, #tpu.memory_space<vmem>>, vector<4x768xf32>
    tpu.vector_store %arg4[%c0_7, %c0_8], %11 {strides = array<i32>} : memref<4x768xf32, #tpu.memory_space<vmem>>, vector<4x768xf32>,
    %c0_9 = arith.constant 0 : index
    %c0_10 = arith.constant 0 : index
    %13 = vector.load %arg5[%c0_9, %c0_10] : memref<4x1xf32, #tpu.memory_space<vmem>>, vector<4x1xf32>
    %cst_11 = arith.constant dense<0.000000e+00> : vector<4xf32>
    %14 = vector.multi_reduction <add>, %5, %cst_11 [1] : vector<4x8xf32> to vector<4xf32>
    %15 = vector.shape_cast %14 : vector<4xf32> to vector<4x1xf32>
    %16 = arith.addf %13, %15 : vector<4x1xf32>
    %c0_12 = arith.constant 0 : index
    %c0_13 = arith.constant 0 : index
    %17 = vector.load %arg5[%c0_12, %c0_13] : memref<4x1xf32, #tpu.memory_space<vmem>>, vector<4x1xf32>
    tpu.vector_store %arg5[%c0_12, %c0_13], %16 {strides = array<i32>} : memref<4x1xf32, #tpu.memory_space<vmem>>, vector<4x1xf32>,
    %c0_i32_14 = arith.constant 0 : i32
    %18 = arith.cmpi eq, %arg1, %c0_i32_14 : i32
    %19 = arith.extui %18 : i1 to i32
    %c0_i32_15 = arith.constant 0 : i32
    %20 = arith.cmpi ne, %19, %c0_i32_15 : i32
    scf.if %20 {
      %c0_16 = arith.constant 0 : index
      %c0_17 = arith.constant 0 : index
      %21 = vector.load %arg4[%c0_16, %c0_17] : memref<4x768xf32, #tpu.memory_space<vmem>>, vector<4x768xf32>
      %c0_18 = arith.constant 0 : index
      %c0_19 = arith.constant 0 : index
      %22 = vector.load %arg5[%c0_18, %c0_19] : memref<4x1xf32, #tpu.memory_space<vmem>>, vector<4x1xf32>
      %cst_20 = arith.constant 9.99999971E-10 : f32
      %23 = vector.broadcast %cst_20 : f32 to vector<4x1xf32>
      %24 = arith.maximumf %22, %23 : vector<4x1xf32>
      %25 = vector.broadcast %24 : vector<4x1xf32> to vector<4x768xf32>
      %26 = arith.divf %21, %25 : vector<4x768xf32>
      %c0_21 = arith.constant 0 : index
      %c0_22 = arith.constant 0 : index
      %27 = vector.load %arg4[%c0_21, %c0_22] : memref<4x768xf32, #tpu.memory_space<vmem>>, vector<4x768xf32>
      tpu.vector_store %arg4[%c0_21, %c0_22], %26 {strides = array<i32>} : memref<4x768xf32, #tpu.memory_space<vmem>>, vector<4x768xf32>,
    } else {
    }
    return
  }
  func.func @transform_0(%arg0: i32, %arg1: i32) -> (i32, i32, i32) {
    %c0_i32 = arith.constant 0 : i32
    %c0_i32_0 = arith.constant 0 : i32
    return %arg0, %arg1, %c0_i32 : i32, i32, i32
  }
  func.func @transform_1(%arg0: i32, %arg1: i32) -> (i32, i32) {
    %c0_i32 = arith.constant 0 : i32
    return %arg0, %arg1 : i32, i32
  }
  func.func @transform_2(%arg0: i32, %arg1: i32) -> (i32, i32) {
    %c0_i32 = arith.constant 0 : i32
    %c0_i32_0 = arith.constant 0 : i32
    return %arg0, %c0_i32 : i32, i32
  }
}

</mosaic_0001>

<llo_original>
// kernel: tpu_custom_call.1
$region0: #{tpu_custom_call.1}
  #allocation0 [shape = 'u32[]', space=smem, size = 0x4, offset = 0x4, fixed_abs, tag = 'smem constant byte address 0x4 - core index']
  #allocation1 [shape = 'u32[144,128]{1,0:T(1,128)}', space=vmem, size = 0x12000, scoped, tag = 'internal scratch']
  #allocation2 [shape = 'f32[4,1]{1,0:T(4,128)}', space=vmem, size = 0x800, scoped, tag = 'scratch operand']
  %s0 = inlined_call_operand.hbm [shape: f32[4,8,768], index: 0, kind: input, shape index: {}]
  %s1 = inlined_call_operand.hbm [shape: s32[4,8], index: 1, kind: input, shape index: {}]
  %s2 = inlined_call_operand.hbm [shape: f32[4,768], index: 2, kind: output, shape index: {}]
  %s3 = sld [smem:[#allocation0]]
  $region34: #{tpu_custom_call.1} parent=0
    _
  %s5 = ssub.s32 1, %s3
  %s6 = scalar_select 0, %s5, %s3
  $region1: #{tpu_custom_call.1} parent=0
    #allocation3 [shape = 'u8[98304]{0}', space=vmem, size = 0x18000, scoped, tag = 'input window, operand 0, single buffered']
    #allocation4 [shape = 's32[1]{0}', space=sflag, size = 0x4, scoped, tag = 'scoped memory for tpu_custom_call.1']
    #allocation5 [shape = 's32[1]{0}', space=sflag, size = 0x4, scoped, tag = 'scoped memory for tpu_custom_call.1']
    #allocation6 [shape = 'u8[2048]{0}', space=vmem, size = 0x800, scoped, tag = 'input window, operand 1, single buffered']
    #allocation7 [shape = 's32[1]{0}', space=sflag, size = 0x4, scoped, tag = 'scoped memory for tpu_custom_call.1']
    #allocation8 [shape = 'u8[12288]{0}', space=vmem, size = 0x3000, scoped, tag = 'output window, operand 0, single buffered']
    %7 = vsyncpa [#allocation4], 0
    %8 = vsyncpa [#allocation7], 0
    %9 = vsyncpa [#allocation5], 0
    // Predicated region
    $region2: #{tpu_custom_call.1} parent=1 // pred_check
      _
    $region3: #{tpu_custom_call.1} parent=1 // pred_check_branch
      %11 = sbr.rel (0) target = $region5
    $region4: #{tpu_custom_call.1} parent=1 // pred_region
      %s13 = ssub.s32 3072, 3072
      %14 = vsyncadd [#allocation4], %s13
      %s15 = sshll.u32 [#allocation3], 4
      %s16 = int_to_ptr.vmem [resolvable:$true] %s15
      %21 = dma.hbm_to_vmem [thread:$0]  %s0, 3072, %s16, [#allocation4], 768, 768, 48
    $region5: #{tpu_custom_call.1} parent=1 // pred_fallthru
      _
    // Predicated region
    $region6: #{tpu_custom_call.1} parent=1 // pred_check
      _
    $region7: #{tpu_custom_call.1} parent=1 // pred_check_branch
      %23 = sbr.rel (0) target = $region9
    $region8: #{tpu_custom_call.1} parent=1 // pred_region
      %s25 = ssub.s32 64, 64
      %26 = vsyncadd [#allocation7], %s25
      %s28 = sshll.u32 [#allocation6], 4
      %s29 = int_to_ptr.vmem [resolvable:$true] %s28
      %31 = dma.hbm_to_vmem [thread:$0]  %s1, 64, %s29, [#allocation7]
    $region9: #{tpu_custom_call.1} parent=1 // pred_fallthru
      _
    // Predicated region
    $region10: #{tpu_custom_call.1} parent=1 // pred_check
      _
    $region11: #{tpu_custom_call.1} parent=1 // pred_check_branch
      %33 = sbr.rel (0) target = $region13
    $region12: #{tpu_custom_call.1} parent=1 // pred_region
      %34 = dma.done [#allocation4], 3072
    $region13: #{tpu_custom_call.1} parent=1 // pred_fallthru
      _
    // Predicated region
    $region14: #{tpu_custom_call.1} parent=1 // pred_check
      _
    $region15: #{tpu_custom_call.1} parent=1 // pred_check_branch
      %36 = sbr.rel (0) target = $region17
    $region16: #{tpu_custom_call.1} parent=1 // pred_region
      %37 = dma.done [#allocation7], 64
    $region17: #{tpu_custom_call.1} parent=1 // pred_fallthru
      _
    %p38 = scmp.eq.s32.totalorder 0, 0
    // Predicated region
    $region18: #{tpu_custom_call.1} parent=1 // pred_check
      %p39 = pneg %p38
    $region19: #{tpu_custom_call.1} parent=1 // pred_check_branch
      %41 = sbr.rel (%p39) target = $region21
    $region20: #{tpu_custom_call.1} parent=1 // pred_region
      %42 = vst [vmem:[#allocation8] sm:$0xff] 0.0
      %43 = vst [vmem:[#allocation8 + $0x8] sm:$0xff] 0.0
      %44 = vst [vmem:[#allocation8 + $0x10] sm:$0xff] 0.0
      %vm45 = vcmask 3072
      %46 = vst.msk [vmem:[#allocation2] sm:$0xf] %vm45, 0.0
    $region21: #{tpu_custom_call.1} parent=1 // pred_fallthru
      _
    %v47 = vld [vmem:[#allocation3] sm:$0xff]
    %v48 = vld [vmem:[#allocation3 + $0x8] sm:$0xff]
    %v49 = vld [vmem:[#allocation3 + $0x10] sm:$0xff]
    %v50 = vld [vmem:[#allocation3 + $0x18] sm:$0xff]
    %v51 = vld [vmem:[#allocation3 + $0x20] sm:$0xff]
    %v52 = vld [vmem:[#allocation3 + $0x28] sm:$0xff]
    %v53 = vld [vmem:[#allocation3 + $0x30] sm:$0xff]
    %v54 = vld [vmem:[#allocation3 + $0x38] sm:$0xff]
    %v55 = vld [vmem:[#allocation3 + $0x40] sm:$0xff]
    %v56 = vld [vmem:[#allocation3 + $0x48] sm:$0xff]
    %v57 = vld [vmem:[#allocation3 + $0x50] sm:$0xff]
    %v58 = vld [vmem:[#allocation3 + $0x58] sm:$0xff]
    %v59 = vld [vmem:[#allocation3 + $0x60] sm:$0xff]
    %v60 = vld [vmem:[#allocation3 + $0x68] sm:$0xff]
    %v61 = vld [vmem:[#allocation3 + $0x70] sm:$0xff]
    %v62 = vld [vmem:[#allocation3 + $0x78] sm:$0xff]
    %v63 = vld [vmem:[#allocation3 + $0x80] sm:$0xff]
    %v64 = vld [vmem:[#allocation3 + $0x88] sm:$0xff]
    %v65 = vld [vmem:[#allocation3 + $0x90] sm:$0xff]
    %v66 = vld [vmem:[#allocation3 + $0x98] sm:$0xff]
    %v67 = vld [vmem:[#allocation3 + $0xa0] sm:$0xff]
    %v68 = vld [vmem:[#allocation3 + $0xa8] sm:$0xff]
    %v69 = vld [vmem:[#allocation3 + $0xb0] sm:$0xff]
    %v70 = vld [vmem:[#allocation3 + $0xb8] sm:$0xff]
    %v71 = vld [vmem:[#allocation6] sm:$0xf]
    %v72 = vcvt.s32.f32 %v71
    %v73 = vld [vmem:[#allocation8] sm:$0xff]
    %v74 = vld [vmem:[#allocation8 + $0x8] sm:$0xff]
    %v75 = vld [vmem:[#allocation8 + $0x10] sm:$0xff]
    %v76 = vlaneseq
    %v77 = vshrl.u32 %v76, 7
    %v78 = vsub.s32 0, %v77
    %v79 = vrot.slane %v72, %v78
    %81 = vbcast.lane.b32.xlu0 %v79, 256
    %v82 = vpop.permute.xlu0 %81
    %v83 = vlaneseq
    %v84 = vshrl.u32 %v83, 7
    %v85 = vsub.s32 1, %v84
    %v86 = vrot.slane %v72, %v85
    %88 = vbcast.lane.b32.xlu0 %v86, 256
    %v89 = vpop.permute.xlu0 %88
    %v90 = vlaneseq
    %v91 = vshrl.u32 %v90, 7
    %v92 = vsub.s32 2, %v91
    %v93 = vrot.slane %v72, %v92
    %95 = vbcast.lane.b32.xlu0 %v93, 256
    %v96 = vpop.permute.xlu0 %95
    %v97 = vlaneseq
    %v98 = vshrl.u32 %v97, 7
    %v99 = vsub.s32 3, %v98
    %v100 = vrot.slane %v72, %v99
    %102 = vbcast.lane.b32.xlu0 %v100, 256
    %v103 = vpop.permute.xlu0 %102
    %v104 = vmul.f32 %v47, %v82
    %v105 = vmul.f32 %v48, %v82
    %v106 = vmul.f32 %v49, %v82
    %v107 = vmul.f32 %v50, %v82
    %v108 = vmul.f32 %v51, %v82
    %v109 = vmul.f32 %v52, %v82
    %v110 = vmul.f32 %v53, %v89
    %v111 = vmul.f32 %v54, %v89
    %v112 = vmul.f32 %v55, %v89
    %v113 = vmul.f32 %v56, %v89
    %v114 = vmul.f32 %v57, %v89
    %v115 = vmul.f32 %v58, %v89
    %v116 = vmul.f32 %v59, %v96
    %v117 = vmul.f32 %v60, %v96
    %v118 = vmul.f32 %v61, %v96
    %v119 = vmul.f32 %v62, %v96
    %v120 = vmul.f32 %v63, %v96
    %v121 = vmul.f32 %v64, %v96
    %v122 = vmul.f32 %v65, %v103
    %v123 = vmul.f32 %v66, %v103
    %v124 = vmul.f32 %v67, %v103
    %v125 = vmul.f32 %v68, %v103
    %v126 = vmul.f32 %v69, %v103
    %v127 = vmul.f32 %v70, %v103
    %v128 = vrot.slane %v104, 4
    %v129 = vadd.f32 %v104, %v128
    %v130 = vrot.slane %v129, 2
    %v131 = vadd.f32 %v129, %v130
    %v132 = vrot.slane %v131, 1
    %v133 = vadd.f32 %v131, %v132
    %v134 = vrot.slane %v105, 4
    %v135 = vadd.f32 %v105, %v134
    %v136 = vrot.slane %v135, 2
    %v137 = vadd.f32 %v135, %v136
    %v138 = vrot.slane %v137, 1
    %v139 = vadd.f32 %v137, %v138
    %v140 = vrot.slane %v106, 4
    %v141 = vadd.f32 %v106, %v140
    %v142 = vrot.slane %v141, 2
    %v143 = vadd.f32 %v141, %v142
    %v144 = vrot.slane %v143, 1
    %v145 = vadd.f32 %v143, %v144
    %v146 = vrot.slane %v107, 4
    %v147 = vadd.f32 %v107, %v146
    %v148 = vrot.slane %v147, 2
    %v149 = vadd.f32 %v147, %v148
    %v150 = vrot.slane %v149, 1
    %v151 = vadd.f32 %v149, %v150
    %v152 = vrot.slane %v108, 4
    %v153 = vadd.f32 %v108, %v152
    %v154 = vrot.slane %v153, 2
    %v155 = vadd.f32 %v153, %v154
    %v156 = vrot.slane %v155, 1
    %v157 = vadd.f32 %v155, %v156
    %v158 = vrot.slane %v109, 4
    %v159 = vadd.f32 %v109, %v158
    %v160 = vrot.slane %v159, 2
    %v161 = vadd.f32 %v159, %v160
    %v162 = vrot.slane %v161, 1
    %v163 = vadd.f32 %v161, %v162
    %v164 = vrot.slane %v110, 4
    %v165 = vadd.f32 %v110, %v164
    %v166 = vrot.slane %v165, 2
    %v167 = vadd.f32 %v165, %v166
    %v168 = vrot.slane %v167, 1
    %v169 = vadd.f32 %v167, %v168
    %v170 = vrot.slane %v111, 4
    %v171 = vadd.f32 %v111, %v170
    %v172 = vrot.slane %v171, 2
    %v173 = vadd.f32 %v171, %v172
    %v174 = vrot.slane %v173, 1
    %v175 = vadd.f32 %v173, %v174
    %v176 = vrot.slane %v112, 4
    %v177 = vadd.f32 %v112, %v176
    %v178 = vrot.slane %v177, 2
    %v179 = vadd.f32 %v177, %v178
    %v180 = vrot.slane %v179, 1
    %v181 = vadd.f32 %v179, %v180
    %v182 = vrot.slane %v113, 4
    %v183 = vadd.f32 %v113, %v182
    %v184 = vrot.slane %v183, 2
    %v185 = vadd.f32 %v183, %v184
    %v186 = vrot.slane %v185, 1
    %v187 = vadd.f32 %v185, %v186
    %v188 = vrot.slane %v114, 4
    %v189 = vadd.f32 %v114, %v188
    %v190 = vrot.slane %v189, 2
    %v191 = vadd.f32 %v189, %v190
    %v192 = vrot.slane %v191, 1
    %v193 = vadd.f32 %v191, %v192
    %v194 = vrot.slane %v115, 4
    %v195 = vadd.f32 %v115, %v194
    %v196 = vrot.slane %v195, 2
    %v197 = vadd.f32 %v195, %v196
    %v198 = vrot.slane %v197, 1
    %v199 = vadd.f32 %v197, %v198
    %v200 = vrot.slane %v116, 4
    %v201 = vadd.f32 %v116, %v200
    %v202 = vrot.slane %v201, 2
    %v203 = vadd.f32 %v201, %v202
    %v204 = vrot.slane %v203, 1
    %v205 = vadd.f32 %v203, %v204
    %v206 = vrot.slane %v117, 4
    %v207 = vadd.f32 %v117, %v206
    %v208 = vrot.slane %v207, 2
    %v209 = vadd.f32 %v207, %v208
    %v210 = vrot.slane %v209, 1
    %v211 = vadd.f32 %v209, %v210
    %v212 = vrot.slane %v118, 4
    %v213 = vadd.f32 %v118, %v212
    %v214 = vrot.slane %v213, 2
    %v215 = vadd.f32 %v213, %v214
    %v216 = vrot.slane %v215, 1
    %v217 = vadd.f32 %v215, %v216
    %v218 = vrot.slane %v119, 4
    %v219 = vadd.f32 %v119, %v218
    %v220 = vrot.slane %v219, 2
    %v221 = vadd.f32 %v219, %v220
    %v222 = vrot.slane %v221, 1
    %v223 = vadd.f32 %v221, %v222
    %v224 = vrot.slane %v120, 4
    %v225 = vadd.f32 %v120, %v224
    %v226 = vrot.slane %v225, 2
    %v227 = vadd.f32 %v225, %v226
    %v228 = vrot.slane %v227, 1
    %v229 = vadd.f32 %v227, %v228
    %v230 = vrot.slane %v121, 4
    %v231 = vadd.f32 %v121, %v230
    %v232 = vrot.slane %v231, 2
    %v233 = vadd.f32 %v231, %v232
    %v234 = vrot.slane %v233, 1
    %v235 = vadd.f32 %v233, %v234
    %v236 = vrot.slane %v122, 4
    %v237 = vadd.f32 %v122, %v236
    %v238 = vrot.slane %v237, 2
    %v239 = vadd.f32 %v237, %v238
    %v240 = vrot.slane %v239, 1
    %v241 = vadd.f32 %v239, %v240
    %v242 = vrot.slane %v123, 4
    %v243 = vadd.f32 %v123, %v242
    %v244 = vrot.slane %v243, 2
    %v245 = vadd.f32 %v243, %v244
    %v246 = vrot.slane %v245, 1
    %v247 = vadd.f32 %v245, %v246
    %v248 = vrot.slane %v124, 4
    %v249 = vadd.f32 %v124, %v248
    %v250 = vrot.slane %v249, 2
    %v251 = vadd.f32 %v249, %v250
    %v252 = vrot.slane %v251, 1
    %v253 = vadd.f32 %v251, %v252
    %v254 = vrot.slane %v125, 4
    %v255 = vadd.f32 %v125, %v254
    %v256 = vrot.slane %v255, 2
    %v257 = vadd.f32 %v255, %v256
    %v258 = vrot.slane %v257, 1
    %v259 = vadd.f32 %v257, %v258
    %v260 = vrot.slane %v126, 4
    %v261 = vadd.f32 %v126, %v260
    %v262 = vrot.slane %v261, 2
    %v263 = vadd.f32 %v261, %v262
    %v264 = vrot.slane %v263, 1
    %v265 = vadd.f32 %v263, %v264
    %v266 = vrot.slane %v127, 4
    %v267 = vadd.f32 %v127, %v266
    %v268 = vrot.slane %v267, 2
    %v269 = vadd.f32 %v267, %v268
    %v270 = vrot.slane %v269, 1
    %v271 = vadd.f32 %v269, %v270
    %v296 = vcombine.low %v133, %v139
    %v297 = vcombine.low %v145, %v151
    %v298 = vcombine.low %v157, %v163
    %v299 = vcombine.low %v169, %v175
    %v300 = vcombine.low %v181, %v187
    %v301 = vcombine.low %v193, %v199
    %v302 = vcombine.low %v205, %v211
    %v303 = vcombine.low %v217, %v223
    %v304 = vcombine.low %v229, %v235
    %v305 = vcombine.low %v241, %v247
    %v306 = vcombine.low %v253, %v259
    %v307 = vcombine.low %v265, %v271
    %v308 = vrot.slane %v299, 7
    %vm309 = vcmask 1041409
    %v310 = vsel %vm309, %v308, %v296
    %vm311 = vcmask 1045509
    %v312 = vsel %vm311, %v308, %v310
    %v313 = vrot.slane %v302, 6
    %vm314 = vcmask 1042434
    %v315 = vsel %vm314, %v313, %v312
    %vm316 = vcmask 1046534
    %v317 = vsel %vm316, %v313, %v315
    %v318 = vrot.slane %v305, 5
    %vm319 = vcmask 1043459
    %v320 = vsel %vm319, %v318, %v317
    %vm321 = vcmask 1047559
    %v322 = vsel %vm321, %v318, %v320
    %v323 = vrot.slane %v300, 7
    %v324 = vsel %vm309, %v323, %v297
    %v325 = vsel %vm311, %v323, %v324
    %v326 = vrot.slane %v303, 6
    %v327 = vsel %vm314, %v326, %v325
    %v328 = vsel %vm316, %v326, %v327
    %v329 = vrot.slane %v306, 5
    %v330 = vsel %vm319, %v329, %v328
    %v331 = vsel %vm321, %v329, %v330
    %v332 = vrot.slane %v301, 7
    %v333 = vsel %vm309, %v332, %v298
    %v334 = vsel %vm311, %v332, %v333
    %v335 = vrot.slane %v304, 6
    %v336 = vsel %vm314, %v335, %v334
    %v337 = vsel %vm316, %v335, %v336
    %v338 = vrot.slane %v307, 5
    %v339 = vsel %vm319, %v338, %v337
    %v340 = vsel %vm321, %v338, %v339
    %v344 = vadd.f32 %v73, %v322
    %v345 = vadd.f32 %v74, %v331
    %v346 = vadd.f32 %v75, %v340
    %347 = vst [vmem:[#allocation8] sm:$0xff] %v344
    %348 = vst [vmem:[#allocation8 + $0x8] sm:$0xff] %v345
    %349 = vst [vmem:[#allocation8 + $0x10] sm:$0xff] %v346
    %v350 = vld [vmem:[#allocation2] sm:$0xf]
    %vm351 = vcmask 60416
    %v352 = vsel %vm351, %v72, 0.0
    %353 = vadd.xlane.f32.xlu0 %v352
    %v354 = vpop.xlane.xlu0 %353
    %v355 = vadd.f32 %v350, %v354
    %vm356 = vcmask 3072
    %357 = vst.msk [vmem:[#allocation2] sm:$0xf] %vm356, %v355
    // Predicated region
    $region22: #{tpu_custom_call.1} parent=1 // pred_check
      %p358 = pneg %p38
    $region23: #{tpu_custom_call.1} parent=1 // pred_check_branch
      %360 = sbr.rel (%p358) target = $region25
    $region24: #{tpu_custom_call.1} parent=1 // pred_region
      %v361 = vld [vmem:[#allocation8] sm:$0xff]
      %v362 = vld [vmem:[#allocation8 + $0x8] sm:$0xff]
      %v363 = vld [vmem:[#allocation8 + $0x10] sm:$0xff]
      %v364 = vld [vmem:[#allocation2] sm:$0xf]
      %v365 = vmax.f32 %v364, 1e-09
      %367 = vset.pattern.permute.xlu0 0
      %368 = vperm.xlu0 %367, %v365
      %v369 = vpop.permute.xlu0 %368
      %v371 = vunpack.c.l.s4 839922192
      %v372 = vunpack.c.0.s8 %v371
      %v373 = vlaneseq
      %v374 = vshrl.u32 %v373, 7
      %v375 = vsub.s32 %v372, %v374
      %v376 = vrot.slane %v369, %v375
      %v378 = vrcp.pop %v376
      %v379 = vmul.f32 %v361, %v378
      %v380 = vmul.f32 %v362, %v378
      %v381 = vmul.f32 %v363, %v378
      %382 = vst [vmem:[#allocation8] sm:$0xff] %v379
      %383 = vst [vmem:[#allocation8 + $0x8] sm:$0xff] %v380
      %384 = vst [vmem:[#allocation8 + $0x10] sm:$0xff] %v381
    $region25: #{tpu_custom_call.1} parent=1 // pred_fallthru
      _
    // Predicated region
    $region26: #{tpu_custom_call.1} parent=1 // pred_check
      _
    $region27: #{tpu_custom_call.1} parent=1 // pred_check_branch
      %386 = sbr.rel (0) target = $region29
    $region28: #{tpu_custom_call.1} parent=1 // pred_region
      %s388 = ssub.s32 384, 384
      %389 = vsyncadd [#allocation5], %s388
      %s391 = sshll.u32 [#allocation8], 4
      %s392 = int_to_ptr.vmem [resolvable:$true] %s391
      %394 = dma.vmem_to_hbm [thread:$0]  %s392, 384, %s2, [#allocation5]
    $region29: #{tpu_custom_call.1} parent=1 // pred_fallthru
      _
    // Predicated region
    $region30: #{tpu_custom_call.1} parent=1 // pred_check
      _
    $region31: #{tpu_custom_call.1} parent=1 // pred_check_branch
      %396 = sbr.rel (0) target = $region33
    $region32: #{tpu_custom_call.1} parent=1 // pred_region
      %397 = dma.done [#allocation5], 384
    $region33: #{tpu_custom_call.1} parent=1 // pred_fallthru
      _
    %398 = vsyncpa [#allocation4], 1
    %399 = vsyncpa [#allocation7], 1
    %400 = vsyncpa [#allocation5], 1

</llo_original>
